<compile_context>
chip_gen: v7x
topology: tpu7x:2x2x1
jax: 0.10.0
libtpu: 0.0.40
codegen_flags: <defaults>
</compile_context>

<pallas_src>
import numpy as np
import jax
import jax.numpy as jnp
from jax.experimental import pallas as pl
from jax.experimental.pallas import tpu as pltpu


# Class-frequency weights used by the surrounding training code (SUNRGBD, 37 classes).
sunrgbd_frq = [0.3829, 0.452448, 0.637584, 0.377464, 0.585595, 0.479574,
               0.781544, 0.982534, 1.017466, 0.624581, 2.589096, 0.980794,
               0.92034, 0.667984, 1.172291, 0.86224, 0.921714, 2.154782,
               1.187832, 1.178115, 1.848545, 1.428922, 2.849658, 0.771605,
               1.656668, 4.483506, 2.209922, 1.12028, 2.790182, 0.706519,
               3.994768, 2.220004, 0.972934, 1.481525, 5.342475, 0.750738,
               4.040773]


def _focal_kernel(x_ref, t_ref, w_ref, o_ref):
    """One (1, C, T) tile of focal loss (class on sublanes, pixels on lanes).

    x_ref: (1, C, T)  logits (f32 or bf16)
    t_ref: (1, 1, T)  int32 targets
    w_ref: (1, C, 1)  f32 class weights (grid-invariant block, stays resident)
    o_ref: (1, 1, T)  f32 per-pixel unreduced focal loss
    """
    x = x_ref[...].astype(jnp.float32)                       # (1, C, T)
    t = t_ref[...]                                           # (1, 1, T) int32
    w = w_ref[...]                                           # (1, C, 1) f32
    C = x.shape[1]

    # --- work that must touch the full (C, T) slab -------------------------------
    m = jnp.max(x, axis=1, keepdims=True)                    # (1, 1, T)
    xm = x - m                                               # (1, C, T)
    e = jnp.exp(xm)                                          # (1, C, T)  (EUP)
    s = jnp.sum(e, axis=1, keepdims=True)                    # (1, 1, T)

    # One shared class==target mask drives both fused one-hot gathers.
    cls = jax.lax.broadcasted_iota(jnp.int32, (1, C, 1), 1)  # (1, C, 1) constant
    mask = cls == t                                          # (1, C, T) via broadcast
    xm_t = jnp.sum(jnp.where(mask, xm, 0.0), axis=1, keepdims=True)  # (1, 1, T)
    w_t = jnp.sum(jnp.where(mask, w, 0.0), axis=1, keepdims=True)    # (1, 1, T)

    # --- remaining focal math on the cheap (1, T) slab ----------------------------
    logp_t = xm_t - jnp.log(s)                               # stable log-softmax gather
    p_t = jnp.exp(logp_t)                                    # = softmax_t, no divide
    one_m = 1.0 - p_t
    # ignore_index / padded lanes: mask all-False -> w_t == 0 -> loss == 0 (finite).
    o_ref[...] = -(w_t * one_m * one_m * logp_t)


def _pick_tile(N, HW, tile_hw):
    """Lane tile: full extent if it fits, else a multiple of 128 (ragged tail is
    masked by the Pallas pipeline).  Keep >=4 grid steps when cheap so v7x's two
    TensorCores stay balanced."""
    tile = min(int(tile_hw), HW)
    if tile < HW:
        tile = max(128, (tile // 128) * 128)
    while N * pl.cdiv(HW, tile) < 4 and tile >= 2048 and tile % 256 == 0:
        tile //= 2
    return tile


def focal_loss_forward(inputs, targets, weight, *, tile_hw=16384):
    """Unreduced focal loss, shape (N, H, W), matching FocalLoss.forward.

    inputs : (N, C, H, W) logits (f32 or bf16; bf16 halves the dominant HBM stream)
    targets: (N, H, W) integer class labels in [0, C)
    weight : (C,) per-class weights
    """
    N, C, H, W = inputs.shape
    HW = H * W

    x = inputs.reshape(N, C, HW)                     # contiguous reshape, no transpose
    t = targets.reshape(N, 1, HW).astype(jnp.int32)
    w = jnp.asarray(weight, jnp.float32).reshape(1, C, 1)

    tile = _pick_tile(N, HW, tile_hw)
    grid = (N, pl.cdiv(HW, tile))

    # Explicit VMEM budget: double-buffered I/O + f32 (C,tile) temporaries headroom.
    in_bytes = jnp.dtype(inputs.dtype).itemsize
    slab = C * tile * 4
    vmem_est = (2 * C * tile * in_bytes              # logits double buffer
                + 4 * tile * 4                       # target + output double buffers
                + 5 * slab                           # f32 temporaries headroom
                + (1 << 20))
    vmem_limit = int(min(max(vmem_est, 32 * 1024 * 1024), 48 * 1024 * 1024))

    cost = pl.CostEstimate(
        flops=int(8 * N * C * HW),
        transcendentals=int(N * (C + 2) * HW),
        bytes_accessed=int(N * C * HW * in_bytes + N * HW * 4 + N * HW * 4),
    )

    out = pl.pallas_call(
        _focal_kernel,
        out_shape=jax.ShapeDtypeStruct((N, 1, HW), jnp.float32),
        grid_spec=pltpu.PrefetchScalarGridSpec(
            num_scalar_prefetch=0,
            grid=grid,
            in_specs=[
                pl.BlockSpec((1, C, tile), lambda n, j: (n, 0, j)),
                pl.BlockSpec((1, 1, tile), lambda n, j: (n, 0, j)),
                pl.BlockSpec((1, C, 1), lambda n, j: (0, 0, 0)),
            ],
            out_specs=pl.BlockSpec((1, 1, tile), lambda n, j: (n, 0, j)),
        ),
        compiler_params=pltpu.CompilerParams(
            dimension_semantics=("parallel", "parallel"),
            vmem_limit_bytes=vmem_limit),
        cost_estimate=cost,
    )(x, t, w)
    return out.reshape(N, H, W)


class FocalLoss:
    """Forward-pass equivalent of the PyTorch FocalLoss module."""

    def __init__(self, gamma=0, weight=None, size_average=True):
        # gamma / size_average kept for signature fidelity: the PyTorch forward
        # hard-codes the exponent 2, and reduce=False makes size_average a no-op.
        self.gamma = gamma
        self.size_average = size_average
        self.weight = jnp.asarray(np.array(weight), jnp.float32)

    def __call__(self, input, target):
        return focal_loss_forward(input, target, self.weight)


def _focal_loss_ref(inputs, targets, weight):
    """Pure-JAX reference (mirrors the PyTorch forward)."""
    logp = jax.nn.log_softmax(inputs.astype(jnp.float32), axis=1)
    p = jnp.exp(logp)
    mod = (1.0 - p) ** 2 * logp
    onehot = jax.nn.one_hot(targets, inputs.shape[1], axis=1, dtype=jnp.float32)
    gathered = jnp.sum(onehot * mod, axis=1)          # (N, H, W)
    w_t = jnp.asarray(weight, jnp.float32)[targets]   # (N, H, W)
    return -w_t * gathered


if __name__ == "__main__":
    key = jax.random.PRNGKey(0)
    k1, k2 = jax.random.split(key)

    N, C, H, W = 2, 37, 16, 16                       # SUNRGBD: 37 classes
    inputs = jax.random.normal(k1, (N, C, H, W), jnp.float32)
    targets = jax.random.randint(k2, (N, H, W), 0, C).astype(jnp.int32)

    loss_fn = FocalLoss(gamma=0, weight=sunrgbd_frq, size_average=True)
    out = loss_fn(inputs, targets)                   # (N, H, W), unreduced
    jax.block_until_ready(out)

    ref = _focal_loss_ref(inputs, targets, jnp.asarray(sunrgbd_frq, jnp.float32))
    np.testing.assert_allclose(np.asarray(out), np.asarray(ref), rtol=1e-3, atol=1e-3)

    # Ragged-tail path: tile (128) does not divide H*W (324); no host-side padding of
    # the logits — the Pallas pipeline masks the partial last block.
    H2, W2 = 18, 18
    k3, k4 = jax.random.split(k2)
    inputs2 = jax.random.normal(k3, (N, C, H2, W2), jnp.float32)
    targets2 = jax.random.randint(k4, (N, H2, W2), 0, C).astype(jnp.int32)
    out2 = focal_loss_forward(inputs2, targets2, loss_fn.weight, tile_hw=128)
    jax.block_until_ready(out2)
    ref2 = _focal_loss_ref(inputs2, targets2, loss_fn.weight)
    np.testing.assert_allclose(np.asarray(out2), np.asarray(ref2), rtol=1e-3, atol=1e-3)

    print("KERNEL_OK")
</pallas_src>

<mosaic_0001>
module attributes {stable_mosaic.version = 11 : i64} {
  func.func @_focal_kernel(%arg0: i32, %arg1: i32, %arg2: memref<1x37x256xf32, #tpu.memory_space<vmem>>, %arg3: memref<1x1x256xi32, #tpu.memory_space<vmem>>, %arg4: memref<1x37x1xf32, #tpu.memory_space<vmem>>, %arg5: memref<1x1x256xf32, #tpu.memory_space<vmem>>) attributes {dimension_semantics = [#tpu.dimension_semantics<parallel>, #tpu.dimension_semantics<parallel>], iteration_bounds = array<i64: 2, 1>, scalar_prefetch = 0 : i64, scratch_operands = 0 : i64, tpu.core_type = #tpu.core_type<tc>, window_params = [{transform_indices = @transform_0, window_bounds = array<i64: 1, 37, 256>}, {transform_indices = @transform_1, window_bounds = array<i64: 1, 1, 256>}, {pipeline_mode = #tpu.pipeline_mode<synchronous>, transform_indices = @transform_2, window_bounds = array<i64: 1, 37, 1>}, {transform_indices = @transform_3, window_bounds = array<i64: 1, 1, 256>}]} {
    %c0 = arith.constant 0 : index
    %c0_0 = arith.constant 0 : index
    %c0_1 = arith.constant 0 : index
    %0 = vector.load %arg2[%c0, %c0_0, %c0_1] : memref<1x37x256xf32, #tpu.memory_space<vmem>>, vector<1x37x256xf32>
    %c0_2 = arith.constant 0 : index
    %c0_3 = arith.constant 0 : index
    %c0_4 = arith.constant 0 : index
    %1 = vector.load %arg3[%c0_2, %c0_3, %c0_4] : memref<1x1x256xi32, #tpu.memory_space<vmem>>, vector<1x1x256xi32>
    %c0_5 = arith.constant 0 : index
    %c0_6 = arith.constant 0 : index
    %c0_7 = arith.constant 0 : index
    %2 = vector.load %arg4[%c0_5, %c0_6, %c0_7] : memref<1x37x1xf32, #tpu.memory_space<vmem>>, vector<1x37x1xf32>
    %cst = arith.constant dense<0xFF800000> : vector<1x256xf32>
    %3 = vector.multi_reduction <maximumf>, %0, %cst [1] : vector<1x37x256xf32> to vector<1x256xf32>
    %4 = vector.shape_cast %3 : vector<1x256xf32> to vector<1x1x256xf32>
    %5 = vector.broadcast %4 : vector<1x1x256xf32> to vector<1x37x256xf32>
    %6 = arith.subf %0, %5 : vector<1x37x256xf32>
    %7 = math.exp %6 : vector<1x37x256xf32>
    %cst_8 = arith.constant dense<0.000000e+00> : vector<1x256xf32>
    %8 = vector.multi_reduction <add>, %7, %cst_8 [1] : vector<1x37x256xf32> to vector<1x256xf32>
    %9 = vector.shape_cast %8 : vector<1x256xf32> to vector<1x1x256xf32>
    %10 = tpu.iota {dimensions = array<i32: 1>} : vector<1x37x1xi32>
    %11 = vector.broadcast %10 : vector<1x37x1xi32> to vector<1x37x256xi32>
    %12 = vector.broadcast %1 : vector<1x1x256xi32> to vector<1x37x256xi32>
    %13 = arith.cmpi eq, %11, %12 : vector<1x37x256xi32>
    %cst_9 = arith.constant 0.000000e+00 : f32
    %14 = vector.broadcast %cst_9 : f32 to vector<1x37x256xf32>
    %15 = arith.select %13, %6, %14 : vector<1x37x256xi1>, vector<1x37x256xf32>
    %cst_10 = arith.constant dense<0.000000e+00> : vector<1x256xf32>
    %16 = vector.multi_reduction <add>, %15, %cst_10 [1] : vector<1x37x256xf32> to vector<1x256xf32>
    %17 = vector.shape_cast %16 : vector<1x256xf32> to vector<1x1x256xf32>
    %cst_11 = arith.constant 0.000000e+00 : f32
    %18 = vector.shape_cast %2 : vector<1x37x1xf32> to vector<1x37x1xf32>
    %19 = vector.broadcast %18 : vector<1x37x1xf32> to vector<1x37x256xf32>
    %20 = vector.broadcast %cst_11 : f32 to vector<1x37x256xf32>
    %21 = arith.select %13, %19, %20 : vector<1x37x256xi1>, vector<1x37x256xf32>
    %cst_12 = arith.constant dense<0.000000e+00> : vector<1x256xf32>
    %22 = vector.multi_reduction <add>, %21, %cst_12 [1] : vector<1x37x256xf32> to vector<1x256xf32>
    %23 = vector.shape_cast %22 : vector<1x256xf32> to vector<1x1x256xf32>
    %24 = math.log %9 : vector<1x1x256xf32>
    %25 = arith.subf %17, %24 : vector<1x1x256xf32>
    %26 = math.exp %25 : vector<1x1x256xf32>
    %cst_13 = arith.constant 1.000000e+00 : f32
    %27 = vector.broadcast %cst_13 : f32 to vector<1x1x256xf32>
    %28 = arith.subf %27, %26 : vector<1x1x256xf32>
    %29 = arith.mulf %23, %28 : vector<1x1x256xf32>
    %30 = arith.mulf %29, %28 : vector<1x1x256xf32>
    %31 = arith.mulf %30, %25 : vector<1x1x256xf32>
    %cst_14 = arith.constant 0.000000e+00 : f32
    %32 = vector.broadcast %cst_14 : f32 to vector<1x1x256xf32>
    %33 = arith.subf %32, %31 : vector<1x1x256xf32>
    %c0_15 = arith.constant 0 : index
    %c0_16 = arith.constant 0 : index
    %c0_17 = arith.constant 0 : index
    %34 = vector.load %arg5[%c0_15, %c0_16, %c0_17] : memref<1x1x256xf32, #tpu.memory_space<vmem>>, vector<1x1x256xf32>
    tpu.vector_store %arg5[%c0_15, %c0_16, %c0_17], %33 {strides = array<i32>} : memref<1x1x256xf32, #tpu.memory_space<vmem>>, vector<1x1x256xf32>,
    return
  }
  func.func @transform_0(%arg0: i32, %arg1: i32) -> (i32, i32, i32) {
    %c0_i32 = arith.constant 0 : i32
    %c0_i32_0 = arith.constant 0 : i32
    return %arg0, %c0_i32, %arg1 : i32, i32, i32
  }
  func.func @transform_1(%arg0: i32, %arg1: i32) -> (i32, i32, i32) {
    %c0_i32 = arith.constant 0 : i32
    %c0_i32_0 = arith.constant 0 : i32
    return %arg0, %c0_i32, %arg1 : i32, i32, i32
  }
  func.func @transform_2(%arg0: i32, %arg1: i32) -> (i32, i32, i32) {
    %c0_i32 = arith.constant 0 : i32
    %c0_i32_0 = arith.constant 0 : i32
    %c0_i32_1 = arith.constant 0 : i32
    %c0_i32_2 = arith.constant 0 : i32
    return %c0_i32, %c0_i32_0, %c0_i32_1 : i32, i32, i32
  }
  func.func @transform_3(%arg0: i32, %arg1: i32) -> (i32, i32, i32) {
    %c0_i32 = arith.constant 0 : i32
    %c0_i32_0 = arith.constant 0 : i32
    return %arg0, %c0_i32, %arg1 : i32, i32, i32
  }
}

</mosaic_0001>

<llo_original>
// kernel: tpu_custom_call.1
$region0: #{tpu_custom_call.1}
  #allocation0 [shape = 'u32[]', space=smem, size = 0x4, offset = 0x4, fixed_abs, tag = 'smem constant byte address 0x4 - core index']
  #allocation1 [shape = 'u32[144,128]{1,0:T(1,128)}', space=vmem, size = 0x12000, scoped, tag = 'internal scratch']
  %s0 = inlined_call_operand.vmem [shape: f32[2,37,256], index: 0, kind: input, shape index: {}]
  %s1 = inlined_call_operand.vmem [shape: s32[2,1,256], index: 1, kind: input, shape index: {}]
  %s2 = inlined_call_operand.vmem [shape: f32[1,37,1], index: 2, kind: input, shape index: {}]
  %s3 = inlined_call_operand.hbm [shape: f32[2,1,256], index: 3, kind: output, shape index: {}]
  %s4 = sld [smem:[#allocation0]]
  $region45: #{tpu_custom_call.1} parent=0
    _
  %s6 = ssub.s32 1, %s4
  %s7 = scalar_select 0, %s6, %s4
  $region1: #{tpu_custom_call.1} parent=0
    #allocation2 [shape = 'u8[2048]{0}', space=vmem, size = 0x800, scoped, tag = 'output window, operand 0']
    #allocation3 [shape = 's32[2]{0}', space=sflag, size = 0x8, scoped, tag = 'scoped memory for tpu_custom_call.1']
    %8 = vsyncpa [#allocation3], 0
    %s9 = scalar_lea.sflag [#allocation3], 1
    %10 = vsyncpa %s9, 0
    loop: start=0, step=1, limit=4
    $region2: #{tpu_custom_call.1} parent=1 // loop_pre_header
      _
    $region3: #{tpu_custom_call.1} parent=1 // loop_header
      %s12 = sphi 0, %s16
      %p13 = scmp.ge.s32.totalorder %s12, 4
      %s19 = sphi 0, %s31
      %s20 = sphi 0, %s27
      %s21 = sphi 0, %s19
      %s22 = sphi 0, %s20
      %s23 = sphi 0, %s21
      %s24 = sphi 0, %s22
      %s36 = sphi 0, %s38
      %s39 = sphi 0, %s36
      %s40 = sphi 0, %s39
      %s56 = sphi 0, %s40
      %s64 = sphi 0, %s66
      %s67 = sphi 0, %s64
      %s68 = sphi 0, %s67
      %s84 = sphi 0, %s68
      %s88 = sphi 0, %s88
      %s90 = sphi 0, %s88
      %s91 = sphi 0, %s90
      %s105 = sphi 0, %s91
      %s113 = sphi 0, %s115
      %s116 = sphi 0, %s113
      %s117 = sphi 0, %s116
      %s133 = sphi 0, %s117
    $region4: #{tpu_custom_call.1} parent=1 // loop_header_branch
      %15 = sbr.rel (%p13) target = $region8
    $region5: #{tpu_custom_call.1} parent=1 // loop_body
      %s17 = ssub.s32 %s12, 1
      %s18 = ssub.s32 %s12, 2
      %s25 = sadd.s32 1, %s20
      %p26 = scmp.ge.s32.totalorder %s25, 1
      %s27 = scalar_select %p26, 0, %s25
      %s28 = sadd.s32 1, %s19
      %s29 = scalar_select %p26, %s28, %s19
      %p30 = scmp.ge.s32.totalorder %s29, 2
      %s31 = scalar_select %p30, 0, %s29
      %s32 = ssub.s32 %s19, %s31
      %s33 = ssub.s32 %s20, %s27
      %s34 = sor.u32 %s32, %s33
      %p35 = scmp.eq.s32.totalorder %s34, 0
      %s37 = sadd.s32 %s36, 1
      %s38 = scalar_select %p35, %s36, %s37
      %p41 = pneg %p35
      %p42 = scmp.eq.s32.totalorder %s12, 1
      %p43 = por %p41, %p42
      %p44 = scmp.ne.s32.totalorder %s36, %s39
      %p45 = scmp.eq.s32.totalorder %s12, 0
      %p46 = por %p44, %p45
      %p47 = scmp.ne.s32.totalorder %s36, %s39
      %p48 = scmp.eq.s32.totalorder %s17, 1
      %p49 = por %p47, %p48
      %p50 = scmp.ne.s32.totalorder %s39, %s40
      %p51 = scmp.eq.s32.totalorder %s17, 0
      %p52 = por %p50, %p51
      %p53 = scmp.ne.s32.totalorder %s39, %s40
      %p54 = scmp.eq.s32.totalorder %s18, 1
      %p55 = por %p53, %p54
      %p57 = scmp.ne.s32.totalorder %s40, %s56
      %p58 = scmp.eq.s32.totalorder %s18, 0
      %p59 = por %p57, %p58
      %s60 = ssub.s32 %s19, %s31
      %s61 = ssub.s32 %s20, %s27
      %s62 = sor.u32 %s60, %s61
      %p63 = scmp.eq.s32.totalorder %s62, 0
      %s65 = sadd.s32 %s64, 1
      %s66 = scalar_select %p63, %s64, %s65
      %p69 = pneg %p63
      %p70 = scmp.eq.s32.totalorder %s12, 1
      %p71 = por %p69, %p70
      %p72 = scmp.ne.s32.totalorder %s64, %s67
      %p73 = scmp.eq.s32.totalorder %s12, 0
      %p74 = por %p72, %p73
      %p75 = scmp.ne.s32.totalorder %s64, %s67
      %p76 = scmp.eq.s32.totalorder %s17, 1
      %p77 = por %p75, %p76
      %p78 = scmp.ne.s32.totalorder %s67, %s68
      %p79 = scmp.eq.s32.totalorder %s17, 0
      %p80 = por %p78, %p79
      %p81 = scmp.ne.s32.totalorder %s67, %s68
      %p82 = scmp.eq.s32.totalorder %s18, 1
      %p83 = por %p81, %p82
      %p85 = scmp.ne.s32.totalorder %s68, %s84
      %p86 = scmp.eq.s32.totalorder %s18, 0
      %p87 = por %p85, %p86
      %s89 = sadd.s32 %s88, 1
      %p92 = scmp.eq.s32.totalorder %s12, 1
      %p93 = scmp.ne.s32.totalorder %s88, %s90
      %p94 = scmp.eq.s32.totalorder %s12, 0
      %p95 = por %p93, %p94
      %p96 = scmp.ne.s32.totalorder %s88, %s90
      %p97 = scmp.eq.s32.totalorder %s17, 1
      %p98 = por %p96, %p97
      %p99 = scmp.ne.s32.totalorder %s90, %s91
      %p100 = scmp.eq.s32.totalorder %s17, 0
      %p101 = por %p99, %p100
      %p102 = scmp.ne.s32.totalorder %s90, %s91
      %p103 = scmp.eq.s32.totalorder %s18, 1
      %p104 = por %p102, %p103
      %p106 = scmp.ne.s32.totalorder %s91, %s105
      %p107 = scmp.eq.s32.totalorder %s18, 0
      %p108 = por %p106, %p107
      %s109 = ssub.s32 %s19, %s31
      %s110 = ssub.s32 %s20, %s27
      %s111 = sor.u32 %s109, %s110
      %p112 = scmp.eq.s32.totalorder %s111, 0
      %s114 = sadd.s32 %s113, 1
      %s115 = scalar_select %p112, %s113, %s114
      %p118 = pneg %p112
      %p119 = scmp.eq.s32.totalorder %s12, 1
      %p120 = por %p118, %p119
      %p121 = scmp.ne.s32.totalorder %s113, %s116
      %p122 = scmp.eq.s32.totalorder %s12, 0
      %p123 = por %p121, %p122
      %p124 = scmp.ne.s32.totalorder %s113, %s116
      %p125 = scmp.eq.s32.totalorder %s17, 1
      %p126 = por %p124, %p125
      %p127 = scmp.ne.s32.totalorder %s116, %s117
      %p128 = scmp.eq.s32.totalorder %s17, 0
      %p129 = por %p127, %p128
      %p130 = scmp.ne.s32.totalorder %s116, %s117
      %p131 = scmp.eq.s32.totalorder %s18, 1
      %p132 = por %p130, %p131
      %p134 = scmp.ne.s32.totalorder %s117, %s133
      %p135 = scmp.eq.s32.totalorder %s18, 0
      %p136 = por %p134, %p135
      %p137 = scmp.le.s32.totalorder 1, %s12
      %p138 = scmp.lt.s32.totalorder %s12, 3
      %p139 = pnand %p137, %p138
      %p140 = pneg %p139
      // Predicated region
      $region9: #{tpu_custom_call.1} parent=5 // pred_check
        _
      $region10: #{tpu_custom_call.1} parent=5 // pred_check_branch
        %142 = sbr.rel (%p139) target = $region12
      $region11: #{tpu_custom_call.1} parent=5 // pred_region
        %s143 = ssub.s32 %s12, 1
        // Predicated region
        $region13: #{tpu_custom_call.1} parent=11 // pred_check
          %p144 = pneg %p101
        $region14: #{tpu_custom_call.1} parent=11 // pred_check_branch
          %146 = sbr.rel (%p144) target = $region16
        $region15: #{tpu_custom_call.1} parent=11 // pred_region
          _
        $region16: #{tpu_custom_call.1} parent=11 // pred_fallthru
          _
      $region12: #{tpu_custom_call.1} parent=5 // pred_fallthru
        _
      %p147 = scmp.lt.s32.totalorder %s12, 2
      // Predicated region
      $region17: #{tpu_custom_call.1} parent=5 // pred_check
        %p148 = pneg %p147
      $region18: #{tpu_custom_call.1} parent=5 // pred_check_branch
        %150 = sbr.rel (%p148) target = $region20
      $region19: #{tpu_custom_call.1} parent=5 // pred_region
        // Predicated region
        $region21: #{tpu_custom_call.1} parent=19 // pred_check
          %p151 = pneg %p46
        $region22: #{tpu_custom_call.1} parent=19 // pred_check_branch
          %153 = sbr.rel (%p151) target = $region24
        $region23: #{tpu_custom_call.1} parent=19 // pred_region
          %s154 = smul.u32 2, %s20
          %p155 = scmp.lt.s32.totalorder %s19, 1
          %s156 = scalar_select %p155, %s19, 1
          %p157 = scmp.lt.s32.totalorder %s154, 1
          %s158 = scalar_select %p157, %s154, 1
          %s159 = smul.addr %s156, 10
          %s160 = sadd.s32 %s158, %s159
          %s161 = smul.addr %s160, 8
          %s162 = scalar_lea.vmem %s0, %s161
          %s163 = smul.u32 2, %s20
        $region24: #{tpu_custom_call.1} parent=19 // pred_fallthru
          _
        // Predicated region
        $region25: #{tpu_custom_call.1} parent=19 // pred_check
          %p164 = pneg %p74
        $region26: #{tpu_custom_call.1} parent=19 // pred_check_branch
          %166 = sbr.rel (%p164) target = $region28
        $region27: #{tpu_custom_call.1} parent=19 // pred_region
          %s167 = smul.u32 2, %s20
          %p168 = scmp.lt.s32.totalorder %s19, 1
          %s169 = scalar_select %p168, %s19, 1
          %p170 = scmp.lt.s32.totalorder %s167, 1
          %s171 = scalar_select %p170, %s167, 1
          %s172 = smul.addr %s169, 2
          %s173 = sadd.s32 %s171, %s172
          %s174 = scalar_lea.vmem %s1, %s173
          %s175 = smul.u32 2, %s20
        $region28: #{tpu_custom_call.1} parent=19 // pred_fallthru
          _
      $region20: #{tpu_custom_call.1} parent=5 // pred_fallthru
        _
      %p176 = scmp.le.s32.totalorder 1, %s12
      %p177 = scmp.lt.s32.totalorder %s12, 3
      %p178 = pnand %p176, %p177
      %p179 = pneg %p178
      // Predicated region
      $region29: #{tpu_custom_call.1} parent=5 // pred_check
        _
      $region30: #{tpu_custom_call.1} parent=5 // pred_check_branch
        %181 = sbr.rel (%p178) target = $region32
      $region31: #{tpu_custom_call.1} parent=5 // pred_region
        %s182 = ssub.s32 %s12, 1
        %s183 = smul.u32 2, %s22
        %p184 = scmp.lt.s32.totalorder %s21, 1
        %s185 = scalar_select %p184, %s21, 1
        %p186 = scmp.lt.s32.totalorder %s183, 1
        %s187 = scalar_select %p186, %s183, 1
        %s188 = smul.addr %s185, 10
        %s189 = sadd.s32 %s187, %s188
        %s190 = smul.addr %s189, 8
        %s191 = scalar_lea.vmem %s0, %s190
        %p192 = pneg %p52
        %p193 = pneg %p49
        %s194 = smul.u32 2, %s22
        %p195 = scmp.lt.s32.totalorder %s21, 1
        %s196 = scalar_select %p195, %s21, 1
        %p197 = scmp.lt.s32.totalorder %s194, 1
        %s198 = scalar_select %p197, %s194, 1
        %s199 = smul.addr %s196, 2
        %s200 = sadd.s32 %s198, %s199
        %s201 = scalar_lea.vmem %s1, %s200
        %p202 = pneg %p80
        %p203 = pneg %p77
        %p204 = pneg %p101
        %p205 = pneg %p98
        %p206 = pneg %p129
        %p207 = pneg %p126
        %s208 = sand.u32 %s116, 1
        %s209 = scalar_lea.sflag [#allocation3], %s208
        %s210 = sand.u32 %s116, 1
        %s211 = smul.addr %s210, 2
        %s212 = scalar_lea.vmem [#allocation2], %s211
        %s213 = smul.u32 2, %s22
        %p214 = scmp.lt.s32.totalorder %s21, 1
        %s215 = scalar_select %p214, %s21, 1
        %p216 = scmp.lt.s32.totalorder %s213, 1
        %s217 = scalar_select %p216, %s213, 1
        %s218 = smul.addr %s215, 10
        %s219 = sadd.s32 %s217, %s218
        %s220 = smul.addr %s219, 8
        %s221 = scalar_lea.vmem %s0, %s220
        %s222 = smul.u32 2, %s22
        %s223 = smul.u32 2, %s22
        %p224 = scmp.lt.s32.totalorder %s21, 1
        %s225 = scalar_select %p224, %s21, 1
        %p226 = scmp.lt.s32.totalorder %s223, 1
        %s227 = scalar_select %p226, %s223, 1
        %s228 = smul.addr %s225, 2
        %s229 = sadd.s32 %s227, %s228
        %s230 = scalar_lea.vmem %s1, %s229
        %s231 = smul.u32 2, %s22
        %s232 = smul.u32 2, %s22
        %v233 = vld [vmem:[%s221] sm:$0xff]
        %v234 = vld [vmem:[%s221 + $0x8] sm:$0xff]
        %v235 = vld [vmem:[%s221 + $0x10] sm:$0xff]
        %v236 = vld [vmem:[%s221 + $0x18] sm:$0xff]
        %v237 = vld [vmem:[%s221 + $0x20] sm:$0xff]
        %v238 = vld [vmem:[%s221 + $0x28] sm:$0xff]
        %v239 = vld [vmem:[%s221 + $0x30] sm:$0xff]
        %v240 = vld [vmem:[%s221 + $0x38] sm:$0xff]
        %v241 = vld [vmem:[%s221 + $0x40] sm:$0x1f]
        %v242 = vld [vmem:[%s221 + $0x48] sm:$0x1f]
        %v243 = vld [vmem:[%s230] sm:$0x3]
        %v244 = vld [vmem:[%s2] sm:$0xff]
        %v245 = vld [vmem:[%s2 + $0x8] sm:$0xff]
        %v246 = vld [vmem:[%s2 + $0x10] sm:$0xff]
        %v247 = vld [vmem:[%s2 + $0x18] sm:$0xff]
        %v248 = vld [vmem:[%s2 + $0x20] sm:$0x1f]
        %v249 = vmax.f32 %v233, %v237
        %v250 = vmax.f32 %v235, %v239
        %vm251 = vcmask 1044480
        %v252 = vsel %vm251, %v241, -inf
        %v253 = vmax.f32 %v249, %v252
        %v254 = vmax.f32 %v253, %v250
        %v255 = vrot.slane %v254, 4
        %v256 = vmax.f32 %v254, %v255
        %v257 = vrot.slane %v256, 2
        %v258 = vmax.f32 %v256, %v257
        %v259 = vrot.slane %v258, 1
        %v260 = vmax.f32 %v258, %v259
        %v261 = vmax.f32 %v234, %v238
        %v262 = vmax.f32 %v236, %v240
        %v263 = vsel %vm251, %v242, -inf
        %v264 = vmax.f32 %v261, %v263
        %v265 = vmax.f32 %v264, %v262
        %v266 = vrot.slane %v265, 4
        %v267 = vmax.f32 %v265, %v266
        %v268 = vrot.slane %v267, 2
        %v269 = vmax.f32 %v267, %v268
        %v270 = vrot.slane %v269, 1
        %v271 = vmax.f32 %v269, %v270
        %v272 = vsub.f32 %v233, %v260
        %v273 = vsub.f32 %v234, %v271
        %v274 = vsub.f32 %v235, %v260
        %v275 = vsub.f32 %v236, %v271
        %v276 = vsub.f32 %v237, %v260
        %v277 = vsub.f32 %v238, %v271
        %v278 = vsub.f32 %v239, %v260
        %v279 = vsub.f32 %v240, %v271
        %v280 = vsub.f32 %v241, %v260
        %v281 = vsub.f32 %v242, %v271
        %v282 = vmul.f32 %v272, 1.442695
        %v283 = vpow.pop %v282
        %v284 = vmul.f32 %v273, 1.442695
        %v285 = vpow.pop %v284
        %v286 = vmul.f32 %v274, 1.442695
        %v287 = vpow.pop %v286
        %v288 = vmul.f32 %v275, 1.442695
        %v289 = vpow.pop %v288
        %v290 = vmul.f32 %v276, 1.442695
        %v291 = vpow.pop %v290
        %v292 = vmul.f32 %v277, 1.442695
        %v293 = vpow.pop %v292
        %v294 = vmul.f32 %v278, 1.442695
        %v295 = vpow.pop %v294
        %v296 = vmul.f32 %v279, 1.442695
        %v297 = vpow.pop %v296
        %v298 = vmul.f32 %v280, 1.442695
        %v299 = vpow.pop %v298
        %v300 = vmul.f32 %v281, 1.442695
        %v301 = vpow.pop %v300
        %v302 = vadd.f32 %v283, %v287
        %v303 = vadd.f32 %v302, %v291
        %v304 = vadd.f32 %v303, %v295
        %v305 = vsel %vm251, %v299, 0.0
        %v306 = vadd.f32 %v304, %v305
        %v307 = vrot.slane %v306, 4
        %v308 = vadd.f32 %v306, %v307
        %v309 = vrot.slane %v308, 2
        %v310 = vadd.f32 %v308, %v309
        %v311 = vrot.slane %v310, 1
        %v312 = vadd.f32 %v310, %v311
        %v313 = vadd.f32 %v285, %v289
        %v314 = vadd.f32 %v313, %v293
        %v315 = vadd.f32 %v314, %v297
        %v316 = vsel %vm251, %v301, 0.0
        %v317 = vadd.f32 %v315, %v316
        %v318 = vrot.slane %v317, 4
        %v319 = vadd.f32 %v317, %v318
        %v320 = vrot.slane %v319, 2
        %v321 = vadd.f32 %v319, %v320
        %v322 = vrot.slane %v321, 1
        %v323 = vadd.f32 %v321, %v322
        %v324 = vlaneseq
        %v325 = vshrl.u32 %v324, 7
        %v326 = vadd.s32 %v325, 8
        %v327 = vadd.s32 %v325, 16
        %v328 = vadd.s32 %v325, 24
        %v329 = vadd.s32 %v325, 32
        %v330 = vlaneseq
        %v331 = vshrl.u32 %v330, 7
        %v332 = vsub.s32 0, %v331
        %v333 = vrot.slane %v243, %v332
        %v334 = vlaneseq
        %v335 = vshrl.u32 %v334, 7
        %v336 = vsub.s32 1, %v335
        %v337 = vrot.slane %v243, %v336
        %vm338 = vcmp.eq.s32.totalorder %v325, %v333
        %vm339 = vcmp.eq.s32.totalorder %v325, %v337
        %vm340 = vcmp.eq.s32.totalorder %v326, %v333
        %vm341 = vcmp.eq.s32.totalorder %v326, %v337
        %vm342 = vcmp.eq.s32.totalorder %v327, %v333
        %vm343 = vcmp.eq.s32.totalorder %v327, %v337
        %vm344 = vcmp.eq.s32.totalorder %v328, %v333
        %vm345 = vcmp.eq.s32.totalorder %v328, %v337
        %vm346 = vcmp.eq.s32.totalorder %v329, %v333
        %vm347 = vcmp.eq.s32.totalorder %v329, %v337
        %v348 = vsel %vm338, %v272, 0.0
        %v349 = vsel %vm339, %v273, 0.0
        %v350 = vsel %vm340, %v274, 0.0
        %v351 = vsel %vm341, %v275, 0.0
        %v352 = vsel %vm342, %v276, 0.0
        %v353 = vsel %vm343, %v277, 0.0
        %v354 = vsel %vm344, %v278, 0.0
        %v355 = vsel %vm345, %v279, 0.0
        %v356 = vsel %vm346, %v280, 0.0
        %v357 = vsel %vm347, %v281, 0.0
        %v358 = vadd.f32 %v348, %v350
        %v359 = vadd.f32 %v358, %v352
        %v360 = vadd.f32 %v359, %v354
        %v361 = vsel %vm251, %v356, 0.0
        %v362 = vadd.f32 %v360, %v361
        %v363 = vrot.slane %v362, 4
        %v364 = vadd.f32 %v362, %v363
        %v365 = vrot.slane %v364, 2
        %v366 = vadd.f32 %v364, %v365
        %v367 = vrot.slane %v366, 1
        %v368 = vadd.f32 %v366, %v367
        %v369 = vadd.f32 %v349, %v351
        %v370 = vadd.f32 %v369, %v353
        %v371 = vadd.f32 %v370, %v355
        %v372 = vsel %vm251, %v357, 0.0
        %v373 = vadd.f32 %v371, %v372
        %v374 = vrot.slane %v373, 4
        %v375 = vadd.f32 %v373, %v374
        %v376 = vrot.slane %v375, 2
        %v377 = vadd.f32 %v375, %v376
        %v378 = vrot.slane %v377, 1
        %v379 = vadd.f32 %v377, %v378
        %381 = vset.pattern.permute.xlu0 0
        %382 = vperm.xlu0 %381, %v244
        %v383 = vpop.permute.xlu0 %382
        %386 = vset.pattern.permute.xlu0 0
        %387 = vperm.xlu0 %386, %v245
        %v388 = vpop.permute.xlu0 %387
        %391 = vset.pattern.permute.xlu0 0
        %392 = vperm.xlu0 %391, %v246
        %v393 = vpop.permute.xlu0 %392
        %396 = vset.pattern.permute.xlu0 0
        %397 = vperm.xlu0 %396, %v247
        %v398 = vpop.permute.xlu0 %397
        %401 = vset.pattern.permute.xlu0 0
        %402 = vperm.xlu0 %401, %v248
        %v403 = vpop.permute.xlu0 %402
        %v405 = vsel %vm338, %v383, 0.0
        %v406 = vsel %vm339, %v383, 0.0
        %v407 = vsel %vm340, %v388, 0.0
        %v408 = vsel %vm341, %v388, 0.0
        %v409 = vsel %vm342, %v393, 0.0
        %v410 = vsel %vm343, %v393, 0.0
        %v411 = vsel %vm344, %v398, 0.0
        %v412 = vsel %vm345, %v398, 0.0
        %v413 = vsel %vm346, %v403, 0.0
        %v414 = vsel %vm347, %v403, 0.0
        %v415 = vadd.f32 %v405, %v407
        %v416 = vadd.f32 %v415, %v409
        %v417 = vadd.f32 %v416, %v411
        %v418 = vsel %vm251, %v413, 0.0
        %v419 = vadd.f32 %v417, %v418
        %v420 = vrot.slane %v419, 4
        %v421 = vadd.f32 %v419, %v420
        %v422 = vrot.slane %v421, 2
        %v423 = vadd.f32 %v421, %v422
        %v424 = vrot.slane %v423, 1
        %v425 = vadd.f32 %v423, %v424
        %v426 = vadd.f32 %v406, %v408
        %v427 = vadd.f32 %v426, %v410
        %v428 = vadd.f32 %v427, %v412
        %v429 = vsel %vm251, %v414, 0.0
        %v430 = vadd.f32 %v428, %v429
        %v431 = vrot.slane %v430, 4
        %v432 = vadd.f32 %v430, %v431
        %v433 = vrot.slane %v432, 2
        %v434 = vadd.f32 %v432, %v433
        %v435 = vrot.slane %v434, 1
        %v436 = vadd.f32 %v434, %v435
        %v437 = vlog2.pop %v312
        %v438 = vmul.f32 %v437, 0.6931472
        %v439 = vlog2.pop %v323
        %v440 = vmul.f32 %v439, 0.6931472
        %v441 = vsub.f32 %v368, %v438
        %v442 = vsub.f32 %v379, %v440
        %v443 = vmul.f32 %v441, 1.442695
        %v444 = vpow.pop %v443
        %v445 = vmul.f32 %v442, 1.442695
        %v446 = vpow.pop %v445
        %v447 = vsub.f32 1.0, %v444
        %v448 = vsub.f32 1.0, %v446
        %v449 = vmul.f32 %v425, %v447
        %v450 = vmul.f32 %v436, %v448
        %v451 = vmul.f32 %v449, %v447
        %v452 = vmul.f32 %v450, %v448
        %v453 = vmul.f32 %v451, %v441
        %v454 = vmul.f32 %v452, %v442
        %v455 = vsub.f32 0.0, %v453
        %v456 = vsub.f32 0.0, %v454
        %v459 = vcombine.low %v455, %v456
        %v461 = vunpack.c.l.s4 1966171168
        %v462 = vunpack.c.0.s8 %v461
        %v463 = vlaneseq
        %v464 = vshrl.u32 %v463, 7
        %v465 = vsub.s32 %v462, %v464
        %v466 = vrot.slane %v459, %v465
        %v468 = vunpack.c.l.s4 1966171168
        %v469 = vunpack.c.0.s8 %v468
        %v470 = vlaneseq
        %v471 = vshrl.u32 %v470, 7
        %v472 = vsub.s32 %v469, %v471
        %v473 = vrot.slane %v466, %v472
        %v475 = vlaneseq
        %vm476 = vcmp.ge.s32.totalorder %v475, 0
        %vm477 = vcmp.lt.s32.totalorder %v475, 256
        %vm478 = vmand %vm476, %vm477
        %479 = vst.msk [vmem:[%s212] sm:$0x3] %vm478, %v473
        %s480 = sand.u32 %s116, 1
        %s481 = scalar_lea.sflag [#allocation3], %s480
        %s482 = sand.u32 %s116, 1
        %s483 = smul.addr %s482, 2
        %s484 = scalar_lea.vmem [#allocation2], %s483
        // Predicated region
        $region33: #{tpu_custom_call.1} parent=31 // pred_check
          %p485 = pneg %p126
        $region34: #{tpu_custom_call.1} parent=31 // pred_check_branch
          %487 = sbr.rel (%p485) target = $region36
        $region35: #{tpu_custom_call.1} parent=31 // pred_region
          %s488 = smul.u32 2, %s22
          %s490 = ssub.s32 32, 32
          %491 = vsyncadd %s481, %s490
          %s492 = smul.addr %s21, 2
          %s493 = sadd.s32 %s488, %s492
          %s494 = smul.addr %s493, 16
          %s495 = scalar_lea.hbm %s3, %s494
          %s497 = sshll.u32 %s484, 4
          %s498 = int_to_ptr.vmem [resolvable:$true] %s497
          %500 = dma.vmem_to_hbm [thread:$0]  %s498, 32, %s495, %s481
        $region36: #{tpu_custom_call.1} parent=31 // pred_fallthru
          _
      $region32: #{tpu_custom_call.1} parent=5 // pred_fallthru
        _
      %p501 = scmp.le.s32.totalorder 2, %s12
      // Predicated region
      $region37: #{tpu_custom_call.1} parent=5 // pred_check
        %p502 = pneg %p501
      $region38: #{tpu_custom_call.1} parent=5 // pred_check_branch
        %504 = sbr.rel (%p502) target = $region40
      $region39: #{tpu_custom_call.1} parent=5 // pred_region
        %s505 = ssub.s32 %s12, 2
        // Predicated region
        $region41: #{tpu_custom_call.1} parent=39 // pred_check
          %p506 = pneg %p132
        $region42: #{tpu_custom_call.1} parent=39 // pred_check_branch
          %508 = sbr.rel (%p506) target = $region44
        $region43: #{tpu_custom_call.1} parent=39 // pred_region
          %s509 = sand.u32 %s117, 1
          %s510 = scalar_lea.sflag [#allocation3], %s509
          %s511 = sand.u32 %s117, 1
          %s512 = smul.addr %s511, 2
          %s513 = scalar_lea.vmem [#allocation2], %s512
          %514 = dma.done %s510, 32
        $region44: #{tpu_custom_call.1} parent=39 // pred_fallthru
          _
      $region40: #{tpu_custom_call.1} parent=5 // pred_fallthru
        _
    $region6: #{tpu_custom_call.1} parent=1 // loop_footer
      %s16 = sadd.s32 1, %s12
    $region7: #{tpu_custom_call.1} parent=1 // loop_footer_branch
      %11 = sbr.rel target = $region3
    $region8: #{tpu_custom_call.1} parent=1 // loop_exit
      _
    %515 = vsyncpa [#allocation3], 1
    %s516 = scalar_lea.sflag [#allocation3], 1
    %517 = vsyncpa %s516, 1

</llo_original>
